<compile_context>
chip_gen: v7x
topology: tpu7x:2x2x1
jax: 0.10.0
libtpu: 0.0.40
codegen_flags: <defaults>
</compile_context>

<pallas_src>
import functools

import jax
import jax.numpy as jnp
from jax import lax
from jax.experimental import pallas as pl
from jax.experimental.pallas import tpu as pltpu


# Packed feature-row indices (batch -> lanes+sublanes, feature -> leading dim).
_ROW_X, _ROW_Y, _ROW_YAW, _ROW_SPEED, _ROW_ACCEL, _ROW_STEER = range(6)
_N_IN_ROWS = 6
_N_OUT_ROWS = 4  # x_next, y_next, yaw_next, speed_next


def _kbm_kernel(params_ref, in_ref, out_ref, *, dt):
    # ---- scalar path: derive every parameter-dependent constant once ----
    front_wb = params_ref[0]
    rear_wb = params_ref[1]
    steer_gain = params_ref[2]
    accel_w = params_ref[3]              # Linear(1, 1, bias=False) weight

    k = rear_wb / (front_wb + rear_wb)   # tan(beta) = k * tan(wheel_steer)
    accel_w_dt = accel_w * dt            # fold encoder weight with dt
    dt_over_rear = dt / rear_wb          # fold dt / rear_wheelbase (scalar div)

    # ---- vector path: each feature is a dense (S_TILE, 128) tile ----
    x = in_ref[_ROW_X]
    y = in_ref[_ROW_Y]
    yaw = in_ref[_ROW_YAW]
    speed = in_ref[_ROW_SPEED]
    accel = jnp.clip(in_ref[_ROW_ACCEL], -1.0, 1.0)
    steer = jnp.clip(in_ref[_ROW_STEER], -1.0, 1.0)

    # beta = arctan(k * tan(steer_gain * steer)) without tan / vector divide:
    #   cos(beta) = cos(w) * inv,  sin(beta) = k * sin(w) * inv,
    #   inv = rsqrt(cos(w)^2 + k^2 * sin(w)^2)
    w = steer_gain * steer
    sw = jnp.sin(w)
    cw = jnp.cos(w)
    inv = lax.rsqrt(cw * cw + (k * k) * (sw * sw))
    cos_beta = cw * inv
    sin_beta = k * sw * inv

    cos_yaw = jnp.cos(yaw)
    sin_yaw = jnp.sin(yaw)
    # angle addition instead of cos(yaw+beta) / sin(yaw+beta)
    cos_yb = cos_yaw * cos_beta - sin_yaw * sin_beta
    sin_yb = sin_yaw * cos_beta + cos_yaw * sin_beta

    sd = speed * dt
    # Dense, unmasked per-feature stores.
    out_ref[0] = x + sd * cos_yb
    out_ref[1] = y + sd * sin_yb
    out_ref[2] = yaw + speed * sin_beta * dt_over_rear
    out_ref[3] = jnp.maximum(speed + accel * accel_w_dt, 0.0)   # F.relu


def kinematic_bicycle_step(params, ego_state, action, *, dt=0.1,
                           max_sublane_tile=1024, use_core_parallel=False):
    """params: (4,) f32 [front_wheelbase, rear_wheelbase, steer_gain, accel_w]."""
    location = ego_state["location"].astype(jnp.float32)   # (B, 2)
    yaw = ego_state["yaw"].astype(jnp.float32)              # (B, 1)
    speed = ego_state["speed"].astype(jnp.float32)          # (B, 1)
    action = action.astype(jnp.float32)                     # (B, 2)
    B = location.shape[0]

    # Single concat + transpose (fusable by XLA) -> (6, B) feature-major slab.
    # TODO(synk): for rollouts, keep state in this packed layout across calls
    # (and fuse the T-step loop into the kernel) so this plumbing disappears.
    packed = jnp.concatenate([location, yaw, speed, action], axis=-1).T

    # Tile the batch as (6, S, 128): lanes = 128, sublane rows = S.
    assert max_sublane_tile % 8 == 0
    b128 = ((B + 127) // 128) * 128
    s_rows = b128 // 128
    if s_rows <= max_sublane_tile:
        s_tile = s_rows                      # whole slab resident, grid=(1,)
        s_pad = s_rows
    else:
        s_tile = max_sublane_tile            # multiple of 8 -> dense vregs
        s_pad = ((s_rows + s_tile - 1) // s_tile) * s_tile
    b_pad = s_pad * 128
    if b_pad != B:
        packed = jnp.pad(packed, ((0, 0), (0, b_pad - B)))  # zero-pad: sin(0)=0, safe
    packed = packed.reshape(_N_IN_ROWS, s_pad, 128)         # free row-major reshape

    grid = (s_pad // s_tile,)

    # VMEM per grid step: (6+4)*s_tile*128*4 B, ~5 MiB at the s_tile=1024 cap;
    # double-buffered in+out ~10.5 MiB, safely under v5e's 16 MiB scoped
    # default and v7x's 32 MiB, so default pipelining depth is kept.
    if use_core_parallel:
        # v7x only: split lane tiles across the 2 TensorCores.
        dims = (pltpu.CORE_PARALLEL,)
    else:
        dims = ("parallel",)

    out_packed = pl.pallas_call(
        functools.partial(_kbm_kernel, dt=dt),
        out_shape=jax.ShapeDtypeStruct((_N_OUT_ROWS, s_pad, 128), jnp.float32),
        grid_spec=pltpu.PrefetchScalarGridSpec(
            num_scalar_prefetch=1,                    # params -> SMEM
            grid=grid,
            in_specs=[pl.BlockSpec((_N_IN_ROWS, s_tile, 128),
                                   lambda i, p: (0, i, 0))],
            out_specs=pl.BlockSpec((_N_OUT_ROWS, s_tile, 128),
                                   lambda i, p: (0, i, 0)),
        ),
        compiler_params=pltpu.CompilerParams(dimension_semantics=dims),
    )(params.astype(jnp.float32), packed)

    out_flat = out_packed.reshape(_N_OUT_ROWS, b_pad)[:, :B]
    return {
        "location": out_flat[0:2, :].T,   # (B, 2)
        "yaw": out_flat[2:3, :].T,        # (B, 1)
        "speed": out_flat[3:4, :].T,      # (B, 1)
    }


def _reference(params, ego_state, action, dt=0.1):
    front_wb, rear_wb, steer_gain, accel_w = [params[i] for i in range(4)]
    location = ego_state["location"]
    yaw = ego_state["yaw"]
    speed = ego_state["speed"]
    acceleration = jnp.clip(action[..., 0:1], -1.0, 1.0)
    steer = jnp.clip(action[..., 1:2], -1.0, 1.0)
    acceleration_encoded = acceleration * accel_w
    wheel_steer = steer_gain * steer
    beta = jnp.arctan(rear_wb / (front_wb + rear_wb) * jnp.tan(wheel_steer))
    location_next = location + speed * jnp.concatenate(
        [jnp.cos(yaw + beta), jnp.sin(yaw + beta)], -1) * dt
    speed_next = speed + acceleration_encoded * dt
    yaw_next = yaw + speed / rear_wb * jnp.sin(beta) * dt
    return {"location": location_next, "yaw": yaw_next,
            "speed": jax.nn.relu(speed_next)}


if __name__ == "__main__":
    key = jax.random.PRNGKey(0)
    k_loc, k_yaw, k_speed, k_action, k_w = jax.random.split(key, 5)

    B = 8
    ego_state = {
        "location": jax.random.normal(k_loc, (B, 2), jnp.float32) * 10.0,
        "yaw": jax.random.uniform(k_yaw, (B, 1), jnp.float32,
                                  minval=-3.14, maxval=3.14),
        "speed": jax.random.uniform(k_speed, (B, 1), jnp.float32,
                                    minval=0.0, maxval=20.0),
    }
    action = jax.random.uniform(k_action, (B, 2), jnp.float32,
                                minval=-2.0, maxval=2.0)

    # Deterministic parameter init (module __init__: three scalars == 1.0,
    # plus the 1x1 no-bias linear weight drawn deterministically).
    accel_w = jax.random.uniform(k_w, (), jnp.float32, minval=-1.0, maxval=1.0)
    params = jnp.array([1.0, 1.0, 1.0, accel_w], dtype=jnp.float32)

    out = kinematic_bicycle_step(params, ego_state, action, dt=0.1)
    out = jax.block_until_ready(out)

    ref = _reference(params, ego_state, action, dt=0.1)
    for name in ("location", "yaw", "speed"):
        assert jnp.allclose(out[name], ref[name], atol=1e-5, rtol=1e-5), name

    print("KERNEL_OK")
</pallas_src>

<mosaic_0001>
module attributes {stable_mosaic.version = 11 : i64} {
  func.func @_kbm_kernel(%arg0: i32, %arg1: memref<4xf32, #tpu.memory_space<smem>>, %arg2: memref<6x1x128xf32, #tpu.memory_space<vmem>>, %arg3: memref<4x1x128xf32, #tpu.memory_space<vmem>>) attributes {dimension_semantics = [#tpu.dimension_semantics<parallel>], iteration_bounds = array<i64: 1>, scalar_prefetch = 1 : i64, scratch_operands = 0 : i64, tpu.core_type = #tpu.core_type<tc>, window_params = [{transform_indices = @transform_0, window_bounds = array<i64: 6, 1, 128>}, {transform_indices = @transform_1, window_bounds = array<i64: 4, 1, 128>}]} {
    %c0 = arith.constant 0 : index
    %0 = memref.load %arg1[%c0] : memref<4xf32, #tpu.memory_space<smem>>
    %c1 = arith.constant 1 : index
    %1 = memref.load %arg1[%c1] : memref<4xf32, #tpu.memory_space<smem>>
    %c2 = arith.constant 2 : index
    %2 = memref.load %arg1[%c2] : memref<4xf32, #tpu.memory_space<smem>>
    %c3 = arith.constant 3 : index
    %3 = memref.load %arg1[%c3] : memref<4xf32, #tpu.memory_space<smem>>
    %4 = arith.addf %0, %1 : f32
    %5 = arith.divf %1, %4 : f32
    %cst = arith.constant 1.000000e-01 : f32
    %6 = arith.mulf %3, %cst : f32
    %cst_0 = arith.constant 1.000000e-01 : f32
    %7 = arith.divf %cst_0, %1 : f32
    %c0_1 = arith.constant 0 : index
    %c0_2 = arith.constant 0 : index
    %c0_3 = arith.constant 0 : index
    %8 = vector.load %arg2[%c0_1, %c0_2, %c0_3] : memref<6x1x128xf32, #tpu.memory_space<vmem>>, vector<1x1x128xf32>
    %9 = vector.shape_cast %8 : vector<1x1x128xf32> to vector<1x128xf32>
    %c1_4 = arith.constant 1 : index
    %c0_5 = arith.constant 0 : index
    %c0_6 = arith.constant 0 : index
    %10 = vector.load %arg2[%c1_4, %c0_5, %c0_6] : memref<6x1x128xf32, #tpu.memory_space<vmem>>, vector<1x1x128xf32>
    %11 = vector.shape_cast %10 : vector<1x1x128xf32> to vector<1x128xf32>
    %c2_7 = arith.constant 2 : index
    %c0_8 = arith.constant 0 : index
    %c0_9 = arith.constant 0 : index
    %12 = vector.load %arg2[%c2_7, %c0_8, %c0_9] : memref<6x1x128xf32, #tpu.memory_space<vmem>>, vector<1x1x128xf32>
    %13 = vector.shape_cast %12 : vector<1x1x128xf32> to vector<1x128xf32>
    %c3_10 = arith.constant 3 : index
    %c0_11 = arith.constant 0 : index
    %c0_12 = arith.constant 0 : index
    %14 = vector.load %arg2[%c3_10, %c0_11, %c0_12] : memref<6x1x128xf32, #tpu.memory_space<vmem>>, vector<1x1x128xf32>
    %15 = vector.shape_cast %14 : vector<1x1x128xf32> to vector<1x128xf32>
    %c4 = arith.constant 4 : index
    %c0_13 = arith.constant 0 : index
    %c0_14 = arith.constant 0 : index
    %16 = vector.load %arg2[%c4, %c0_13, %c0_14] : memref<6x1x128xf32, #tpu.memory_space<vmem>>, vector<1x1x128xf32>
    %17 = vector.shape_cast %16 : vector<1x1x128xf32> to vector<1x128xf32>
    %cst_15 = arith.constant -1.000000e+00 : f32
    %cst_16 = arith.constant 1.000000e+00 : f32
    %18 = vector.broadcast %cst_15 : f32 to vector<1x128xf32>
    %19 = arith.maximumf %18, %17 : vector<1x128xf32>
    %20 = vector.broadcast %cst_16 : f32 to vector<1x128xf32>
    %21 = arith.minimumf %20, %19 : vector<1x128xf32>
    %c5 = arith.constant 5 : index
    %c0_17 = arith.constant 0 : index
    %c0_18 = arith.constant 0 : index
    %22 = vector.load %arg2[%c5, %c0_17, %c0_18] : memref<6x1x128xf32, #tpu.memory_space<vmem>>, vector<1x1x128xf32>
    %23 = vector.shape_cast %22 : vector<1x1x128xf32> to vector<1x128xf32>
    %cst_19 = arith.constant -1.000000e+00 : f32
    %cst_20 = arith.constant 1.000000e+00 : f32
    %24 = vector.broadcast %cst_19 : f32 to vector<1x128xf32>
    %25 = arith.maximumf %24, %23 : vector<1x128xf32>
    %26 = vector.broadcast %cst_20 : f32 to vector<1x128xf32>
    %27 = arith.minimumf %26, %25 : vector<1x128xf32>
    %28 = vector.broadcast %2 : f32 to vector<1x128xf32>
    %29 = arith.mulf %28, %27 : vector<1x128xf32>
    %30 = math.sin %29 : vector<1x128xf32>
    %31 = math.cos %29 : vector<1x128xf32>
    %32 = arith.mulf %31, %31 : vector<1x128xf32>
    %33 = arith.mulf %5, %5 : f32
    %34 = arith.mulf %30, %30 : vector<1x128xf32>
    %35 = vector.broadcast %33 : f32 to vector<1x128xf32>
    %36 = arith.mulf %35, %34 : vector<1x128xf32>
    %37 = arith.addf %32, %36 : vector<1x128xf32>
    %38 = math.rsqrt %37 : vector<1x128xf32>
    %39 = arith.mulf %31, %38 : vector<1x128xf32>
    %40 = vector.broadcast %5 : f32 to vector<1x128xf32>
    %41 = arith.mulf %40, %30 : vector<1x128xf32>
    %42 = arith.mulf %41, %38 : vector<1x128xf32>
    %43 = math.cos %13 : vector<1x128xf32>
    %44 = math.sin %13 : vector<1x128xf32>
    %45 = arith.mulf %43, %39 : vector<1x128xf32>
    %46 = arith.mulf %44, %42 : vector<1x128xf32>
    %47 = arith.subf %45, %46 : vector<1x128xf32>
    %48 = arith.mulf %44, %39 : vector<1x128xf32>
    %49 = arith.mulf %43, %42 : vector<1x128xf32>
    %50 = arith.addf %48, %49 : vector<1x128xf32>
    %cst_21 = arith.constant 1.000000e-01 : f32
    %51 = vector.broadcast %cst_21 : f32 to vector<1x128xf32>
    %52 = arith.mulf %15, %51 : vector<1x128xf32>
    %53 = arith.mulf %52, %47 : vector<1x128xf32>
    %54 = arith.addf %9, %53 : vector<1x128xf32>
    %c0_22 = arith.constant 0 : index
    %c0_23 = arith.constant 0 : index
    %c0_24 = arith.constant 0 : index
    %55 = vector.load %arg3[%c0_22, %c0_23, %c0_24] : memref<4x1x128xf32, #tpu.memory_space<vmem>>, vector<1x1x128xf32>
    %56 = vector.shape_cast %55 : vector<1x1x128xf32> to vector<1x128xf32>
    %57 = vector.shape_cast %54 : vector<1x128xf32> to vector<1x1x128xf32>
    tpu.vector_store %arg3[%c0_22, %c0_23, %c0_24], %57 {strides = array<i32>} : memref<4x1x128xf32, #tpu.memory_space<vmem>>, vector<1x1x128xf32>,
    %58 = arith.mulf %52, %50 : vector<1x128xf32>
    %59 = arith.addf %11, %58 : vector<1x128xf32>
    %c1_25 = arith.constant 1 : index
    %c0_26 = arith.constant 0 : index
    %c0_27 = arith.constant 0 : index
    %60 = vector.load %arg3[%c1_25, %c0_26, %c0_27] : memref<4x1x128xf32, #tpu.memory_space<vmem>>, vector<1x1x128xf32>
    %61 = vector.shape_cast %60 : vector<1x1x128xf32> to vector<1x128xf32>
    %62 = vector.shape_cast %59 : vector<1x128xf32> to vector<1x1x128xf32>
    tpu.vector_store %arg3[%c1_25, %c0_26, %c0_27], %62 {strides = array<i32>} : memref<4x1x128xf32, #tpu.memory_space<vmem>>, vector<1x1x128xf32>,
    %63 = arith.mulf %15, %42 : vector<1x128xf32>
    %64 = vector.broadcast %7 : f32 to vector<1x128xf32>
    %65 = arith.mulf %63, %64 : vector<1x128xf32>
    %66 = arith.addf %13, %65 : vector<1x128xf32>
    %c2_28 = arith.constant 2 : index
    %c0_29 = arith.constant 0 : index
    %c0_30 = arith.constant 0 : index
    %67 = vector.load %arg3[%c2_28, %c0_29, %c0_30] : memref<4x1x128xf32, #tpu.memory_space<vmem>>, vector<1x1x128xf32>
    %68 = vector.shape_cast %67 : vector<1x1x128xf32> to vector<1x128xf32>
    %69 = vector.shape_cast %66 : vector<1x128xf32> to vector<1x1x128xf32>
    tpu.vector_store %arg3[%c2_28, %c0_29, %c0_30], %69 {strides = array<i32>} : memref<4x1x128xf32, #tpu.memory_space<vmem>>, vector<1x1x128xf32>,
    %70 = vector.broadcast %6 : f32 to vector<1x128xf32>
    %71 = arith.mulf %21, %70 : vector<1x128xf32>
    %72 = arith.addf %15, %71 : vector<1x128xf32>
    %cst_31 = arith.constant 0.000000e+00 : f32
    %73 = vector.broadcast %cst_31 : f32 to vector<1x128xf32>
    %74 = arith.maximumf %72, %73 : vector<1x128xf32>
    %c3_32 = arith.constant 3 : index
    %c0_33 = arith.constant 0 : index
    %c0_34 = arith.constant 0 : index
    %75 = vector.load %arg3[%c3_32, %c0_33, %c0_34] : memref<4x1x128xf32, #tpu.memory_space<vmem>>, vector<1x1x128xf32>
    %76 = vector.shape_cast %75 : vector<1x1x128xf32> to vector<1x128xf32>
    %77 = vector.shape_cast %74 : vector<1x128xf32> to vector<1x1x128xf32>
    tpu.vector_store %arg3[%c3_32, %c0_33, %c0_34], %77 {strides = array<i32>} : memref<4x1x128xf32, #tpu.memory_space<vmem>>, vector<1x1x128xf32>,
    return
  }
  func.func @transform_0(%arg0: i32, %arg1: memref<4xf32, #tpu.memory_space<smem>>) -> (i32, i32, i32) {
    %c0_i32 = arith.constant 0 : i32
    %c0_i32_0 = arith.constant 0 : i32
    %c0_i32_1 = arith.constant 0 : i32
    return %c0_i32, %arg0, %c0_i32_0 : i32, i32, i32
  }
  func.func @transform_1(%arg0: i32, %arg1: memref<4xf32, #tpu.memory_space<smem>>) -> (i32, i32, i32) {
    %c0_i32 = arith.constant 0 : i32
    %c0_i32_0 = arith.constant 0 : i32
    %c0_i32_1 = arith.constant 0 : i32
    return %c0_i32, %arg0, %c0_i32_0 : i32, i32, i32
  }
}

</mosaic_0001>

<llo_original>
// kernel: tpu_custom_call.1
$region0: #{tpu_custom_call.1}
  #allocation0 [shape = 'u32[]', space=smem, size = 0x4, offset = 0x4, fixed_abs, tag = 'smem constant byte address 0x4 - core index']
  #allocation1 [shape = 'u32[144,128]{1,0:T(1,128)}', space=vmem, size = 0x12000, scoped, tag = 'internal scratch']
  #allocation2 [shape = 's32[1]{0}', space=sflag, size = 0x4, scoped, tag = 'scoped memory for tpu_custom_call.1']
  #allocation3 [shape = 'u8[512]{0}', space=smem, size = 0x200, scoped, tag = 'prefetched SMEM operand 0']
  %s0 = inlined_call_operand.hbm [shape: f32[4], index: 0, kind: input, shape index: {}]
  %s1 = inlined_call_operand.hbm [shape: f32[6,1,128], index: 1, kind: input, shape index: {}]
  %s2 = inlined_call_operand.hbm [shape: f32[4,1,128], index: 2, kind: output, shape index: {}]
  %s3 = sld [smem:[#allocation0]]
  $region18: #{tpu_custom_call.1} parent=0
    _
  %s5 = ssub.s32 1, %s3
  %s6 = scalar_select 0, %s5, %s3
  %8 = dma.hbm_to_smem %s0, 16, [#allocation3], [#allocation2]
  %9 = dma.done [#allocation2], 16
  %10 = sfence
  $region1: #{tpu_custom_call.1} parent=0
    #allocation4 [shape = 'u8[3072]{0}', space=vmem, size = 0xc00, scoped, tag = 'input window, operand 1, single buffered']
    #allocation5 [shape = 's32[1]{0}', space=sflag, size = 0x4, scoped, tag = 'scoped memory for tpu_custom_call.1']
    #allocation6 [shape = 's32[1]{0}', space=sflag, size = 0x4, scoped, tag = 'scoped memory for tpu_custom_call.1']
    #allocation7 [shape = 'u8[2048]{0}', space=vmem, size = 0x800, scoped, tag = 'output window, operand 0, single buffered']
    %11 = vsyncpa [#allocation5], 0
    %12 = vsyncpa [#allocation6], 0
    // Predicated region
    $region2: #{tpu_custom_call.1} parent=1 // pred_check
      _
    $region3: #{tpu_custom_call.1} parent=1 // pred_check_branch
      %14 = sbr.rel (0) target = $region5
    $region4: #{tpu_custom_call.1} parent=1 // pred_region
      %s16 = ssub.s32 96, 96
      %17 = vsyncadd [#allocation5], %s16
      %s18 = sshll.u32 [#allocation4], 4
      %s19 = int_to_ptr.vmem [resolvable:$true] %s18
      %24 = dma.hbm_to_vmem [thread:$0]  %s1, 96, %s19, [#allocation5], 16, 16, 1
    $region5: #{tpu_custom_call.1} parent=1 // pred_fallthru
      _
    // Predicated region
    $region6: #{tpu_custom_call.1} parent=1 // pred_check
      _
    $region7: #{tpu_custom_call.1} parent=1 // pred_check_branch
      %26 = sbr.rel (0) target = $region9
    $region8: #{tpu_custom_call.1} parent=1 // pred_region
      %27 = dma.done [#allocation5], 96
    $region9: #{tpu_custom_call.1} parent=1 // pred_fallthru
      _
    %s28 = sld [smem:[#allocation3]]
    %s29 = sld [smem:[#allocation3 + $0x1]]
    %s30 = sld [smem:[#allocation3 + $0x2]]
    %s31 = sld [smem:[#allocation3 + $0x3]]
    %s32 = sadd.f32 %s28, %s29
    %v33 = vstv %s32
    %v34 = vrcp.pop %v33
    %s35 = vtos %v34
    %s36 = smul.f32 %s29, %s35
    %s37 = smul.f32 %s31, 0.1
    %v38 = vstv %s29
    %v39 = vrcp.pop %v38
    %s40 = vtos %v39
    %s41 = smul.f32 0.1, %s40
    %v42 = vld [vmem:[#allocation4] sm:$0x1]
    %s43 = scalar_lea.vmem [#allocation4], 1
    %v44 = vld [vmem:[%s43] sm:$0x1]
    %s45 = scalar_lea.vmem [#allocation4], 2
    %v46 = vld [vmem:[%s45] sm:$0x1]
    %s47 = scalar_lea.vmem [#allocation4], 3
    %v48 = vld [vmem:[%s47] sm:$0x1]
    %s49 = scalar_lea.vmem [#allocation4], 4
    %v50 = vld [vmem:[%s49] sm:$0x1]
    %v51 = vmax.f32 %v50, -1.0
    %v52 = vmin.f32 %v51, 1.0
    %s53 = scalar_lea.vmem [#allocation4], 5
    %v54 = vld [vmem:[%s53] sm:$0x1]
    %v55 = vmax.f32 %v54, -1.0
    %v56 = vmin.f32 %v55, 1.0
    %v57 = vstv %s30
    %v58 = vmul.f32 %v57, %v56
    %v59 = vand.u32 2147483647, %v58
    %vm60 = vcmp.le.f32.partialorder %v59, 0.7853982
    %vm61 = vcmp.lt.s32.totalorder %v58, 0
    %v62 = vand.u32 %v58, 2139095040
    %v63 = vshrl.u32 %v62, 23
    %v64 = vsub.s32 %v63, 127
    %v65 = vand.u32 2147483647, %v58
    %v66 = vand.u32 %v65, 8388607
    %v67 = vor.u32 %v66, 8388608
    %v68 = vsub.s32 0, %v67
    %v69 = vadd.s32 %v64, 1
    %vm70 = vcmp.gt.s32.totalorder %v69, 0
    %v71 = vsel %vm70, %v69, 0
    %v72 = vshrl.u32 %v71, 5
    %v73 = vand.u32 %v71, 31
    %v74 = vsub.s32 32, %v73
    %v75 = vshrl.u32 683565275, %v74
    %v76 = vshll.u32 683565275, %v73
    %v77 = vshrl.u32 2475754826, %v74
    %v78 = vor.u32 %v76, %v77
    %v79 = vshll.u32 2475754826, %v73
    %v80 = vshrl.u32 2131351028, %v74
    %v81 = vor.u32 %v79, %v80
    %v82 = vshll.u32 2131351028, %v73
    %v83 = vshrl.u32 2102212464, %v74
    %v84 = vor.u32 %v82, %v83
    %v85 = vshll.u32 2102212464, %v73
    %v86 = vshrl.u32 920167782, %v74
    %v87 = vor.u32 %v85, %v86
    %v88 = vshll.u32 920167782, %v73
    %v89 = vshrl.u32 1326507024, %v74
    %v90 = vor.u32 %v88, %v89
    %vm91 = vcmp.lt.s32.totalorder %v72, 1
    %vm92 = vcmp.lt.s32.totalorder %v72, 2
    %vm93 = vcmp.lt.s32.totalorder %v72, 3
    %vm94 = vcmp.lt.s32.totalorder %v72, 4
    %v95 = vsel %vm91, %v75, %v78
    %v96 = vsel %vm94, %v84, 2102212464
    %v97 = vsel %vm93, %v81, %v96
    %v98 = vsel %vm92, %v95, %v97
    %v99 = vsel %vm91, %v78, %v81
    %v100 = vsel %vm94, %v87, 920167782
    %v101 = vsel %vm93, %v84, %v100
    %v102 = vsel %vm92, %v99, %v101
    %v103 = vsel %vm91, %v81, %v84
    %v104 = vsel %vm94, %v90, 1326507024
    %v105 = vsel %vm93, %v87, %v104
    %v106 = vsel %vm92, %v103, %v105
    %v107 = vshll.u32 %v67, 8
    %v108 = vmul.u32.u64.compose %v107, %v106
    %v109 = vextract.low.u32 %v108
    %v110 = vextract.high.u32 %v108
    %v111 = vmul.u32.u64.compose %v107, %v102
    %v112 = vextract.low.u32 %v111
    %v113 = vextract.high.u32 %v111
    %v114 = vmul.u32 %v107, %v98
    %v115 = vadd.s32 %v110, %v112
    %vm116 = vc.u32 %v110, %v112
    %v117 = vadd.s32 %v113, 1
    %v118 = vsel %vm116, %v117, %v113
    %v119 = vadd.s32 %v114, %v118
    %v120 = vadd.s32 %v119, 536870912
    %v121 = vshrl.u32 %v120, 30
    %v122 = vshll.u32 %v121, 30
    %v123 = vsub.s32 %v119, %v122
    %vm124 = vcmp.lt.s32.totalorder %v123, 0
    %v125 = vsub.s32 0, %v123
    %v126 = vsel %vm124, %v125, %v123
    %v127 = vclz %v126
    %v128 = vsub.s32 %v127, 2
    %vm129 = vcmp.gt.s32.totalorder 0, %v128
    %v130 = vsel %vm129, 0, %v128
    %v131 = vsub.s32 32, %v130
    %v132 = vshll.u32 %v123, %v130
    %v133 = vshrl.u32 %v115, %v131
    %v134 = vor.u32 %v132, %v133
    %v135 = vsub.s32 4294967266, %v130
    %v136 = vadd.s32 %v135, 127
    %v137 = vshll.u32 %v136, 23
    %v138 = vor.u32 4788187, %v137
    %v139 = vand.u32 2147483647, %v138
    %v141 = vcvt.s32.f32 %v134
    %v142 = vmul.f32 %v141, %v139
    %v143 = vxor.u32 %v142, 2147483648
    %v144 = vsel %vm61, %v143, %v142
    %v145 = vsub.s32 4, %v121
    %v146 = vsel %vm61, %v145, %v121
    %v147 = vsel %vm60, %v58, %v144
    %v148 = vsel %vm60, 0, %v146
    %v149 = vcosq.f32.pop %v147
    %v150 = vsinq.f32.pop %v147
    %vm151 = vweird.f32 %v58
    %v152 = vadd.s32 %v148, 3
    %v153 = vand.u32 %v152, 3
    %vm154 = vcmp.lt.s32.totalorder %v153, 2
    %vm155 = vcmp.eq.s32.totalorder %v153, 0
    %v156 = vxor.u32 %v150, 2147483648
    %v157 = vsel %vm155, %v149, %v156
    %vm158 = vcmp.eq.s32.totalorder %v153, 2
    %v159 = vxor.u32 %v149, 2147483648
    %v160 = vsel %vm158, %v159, %v150
    %v161 = vsel %vm154, %v157, %v160
    %v162 = vsel %vm151, nan, %v161
    %v163 = vand.u32 2147483647, %v58
    %vm164 = vcmp.le.f32.partialorder %v163, 0.7853982
    %vm165 = vcmp.lt.s32.totalorder %v58, 0
    %v166 = vand.u32 %v58, 2139095040
    %v167 = vshrl.u32 %v166, 23
    %v168 = vsub.s32 %v167, 127
    %v169 = vand.u32 2147483647, %v58
    %v170 = vand.u32 %v169, 8388607
    %v171 = vor.u32 %v170, 8388608
    %v172 = vsub.s32 0, %v171
    %v173 = vadd.s32 %v168, 1
    %vm174 = vcmp.gt.s32.totalorder %v173, 0
    %v175 = vsel %vm174, %v173, 0
    %v176 = vshrl.u32 %v175, 5
    %v177 = vand.u32 %v175, 31
    %v178 = vsub.s32 32, %v177
    %v179 = vshrl.u32 683565275, %v178
    %v180 = vshll.u32 683565275, %v177
    %v181 = vshrl.u32 2475754826, %v178
    %v182 = vor.u32 %v180, %v181
    %v183 = vshll.u32 2475754826, %v177
    %v184 = vshrl.u32 2131351028, %v178
    %v185 = vor.u32 %v183, %v184
    %v186 = vshll.u32 2131351028, %v177
    %v187 = vshrl.u32 2102212464, %v178
    %v188 = vor.u32 %v186, %v187
    %v189 = vshll.u32 2102212464, %v177
    %v190 = vshrl.u32 920167782, %v178
    %v191 = vor.u32 %v189, %v190
    %v192 = vshll.u32 920167782, %v177
    %v193 = vshrl.u32 1326507024, %v178
    %v194 = vor.u32 %v192, %v193
    %vm195 = vcmp.lt.s32.totalorder %v176, 1
    %vm196 = vcmp.lt.s32.totalorder %v176, 2
    %vm197 = vcmp.lt.s32.totalorder %v176, 3
    %vm198 = vcmp.lt.s32.totalorder %v176, 4
    %v199 = vsel %vm195, %v179, %v182
    %v200 = vsel %vm198, %v188, 2102212464
    %v201 = vsel %vm197, %v185, %v200
    %v202 = vsel %vm196, %v199, %v201
    %v203 = vsel %vm195, %v182, %v185
    %v204 = vsel %vm198, %v191, 920167782
    %v205 = vsel %vm197, %v188, %v204
    %v206 = vsel %vm196, %v203, %v205
    %v207 = vsel %vm195, %v185, %v188
    %v208 = vsel %vm198, %v194, 1326507024
    %v209 = vsel %vm197, %v191, %v208
    %v210 = vsel %vm196, %v207, %v209
    %v211 = vshll.u32 %v171, 8
    %v212 = vmul.u32.u64.compose %v211, %v210
    %v213 = vextract.low.u32 %v212
    %v214 = vextract.high.u32 %v212
    %v215 = vmul.u32.u64.compose %v211, %v206
    %v216 = vextract.low.u32 %v215
    %v217 = vextract.high.u32 %v215
    %v218 = vmul.u32 %v211, %v202
    %v219 = vadd.s32 %v214, %v216
    %vm220 = vc.u32 %v214, %v216
    %v221 = vadd.s32 %v217, 1
    %v222 = vsel %vm220, %v221, %v217
    %v223 = vadd.s32 %v218, %v222
    %v224 = vadd.s32 %v223, 536870912
    %v225 = vshrl.u32 %v224, 30
    %v226 = vshll.u32 %v225, 30
    %v227 = vsub.s32 %v223, %v226
    %vm228 = vcmp.lt.s32.totalorder %v227, 0
    %v229 = vsub.s32 0, %v227
    %v230 = vsel %vm228, %v229, %v227
    %v231 = vclz %v230
    %v232 = vsub.s32 %v231, 2
    %vm233 = vcmp.gt.s32.totalorder 0, %v232
    %v234 = vsel %vm233, 0, %v232
    %v235 = vsub.s32 32, %v234
    %v236 = vshll.u32 %v227, %v234
    %v237 = vshrl.u32 %v219, %v235
    %v238 = vor.u32 %v236, %v237
    %v239 = vsub.s32 4294967266, %v234
    %v240 = vadd.s32 %v239, 127
    %v241 = vshll.u32 %v240, 23
    %v242 = vor.u32 4788187, %v241
    %v243 = vand.u32 2147483647, %v242
    %v245 = vcvt.s32.f32 %v238
    %v246 = vmul.f32 %v245, %v243
    %v247 = vxor.u32 %v246, 2147483648
    %v248 = vsel %vm165, %v247, %v246
    %v249 = vsub.s32 4, %v225
    %v250 = vsel %vm165, %v249, %v225
    %v251 = vsel %vm164, %v58, %v248
    %v252 = vsel %vm164, 0, %v250
    %v253 = vcosq.f32.pop %v251
    %v254 = vsinq.f32.pop %v251
    %vm255 = vweird.f32 %v58
    %v256 = vand.u32 %v252, 3
    %vm257 = vcmp.lt.s32.totalorder %v256, 2
    %vm258 = vcmp.eq.s32.totalorder %v256, 0
    %v259 = vxor.u32 %v254, 2147483648
    %v260 = vsel %vm258, %v253, %v259
    %vm261 = vcmp.eq.s32.totalorder %v256, 2
    %v262 = vxor.u32 %v253, 2147483648
    %v263 = vsel %vm261, %v262, %v254
    %v264 = vsel %vm257, %v260, %v263
    %v265 = vsel %vm255, nan, %v264
    %v266 = vmul.f32 %v265, %v265
    %s267 = smul.f32 %s36, %s36
    %v268 = vmul.f32 %v162, %v162
    %v269 = vstv %s267
    %v270 = vmul.f32 %v269, %v268
    %v271 = vadd.f32 %v266, %v270
    %v272 = vrsqrt.pop %v271
    %v273 = vmul.f32 %v265, %v272
    %v274 = vstv %s36
    %v275 = vmul.f32 %v274, %v162
    %v276 = vmul.f32 %v275, %v272
    %v277 = vand.u32 2147483647, %v46
    %vm278 = vcmp.le.f32.partialorder %v277, 0.7853982
    %vm279 = vcmp.lt.s32.totalorder %v46, 0
    %v280 = vand.u32 %v46, 2139095040
    %v281 = vshrl.u32 %v280, 23
    %v282 = vsub.s32 %v281, 127
    %v283 = vand.u32 2147483647, %v46
    %v284 = vand.u32 %v283, 8388607
    %v285 = vor.u32 %v284, 8388608
    %v286 = vsub.s32 0, %v285
    %v287 = vadd.s32 %v282, 1
    %vm288 = vcmp.gt.s32.totalorder %v287, 0
    %v289 = vsel %vm288, %v287, 0
    %v290 = vshrl.u32 %v289, 5
    %v291 = vand.u32 %v289, 31
    %v292 = vsub.s32 32, %v291
    %v293 = vshrl.u32 683565275, %v292
    %v294 = vshll.u32 683565275, %v291
    %v295 = vshrl.u32 2475754826, %v292
    %v296 = vor.u32 %v294, %v295
    %v297 = vshll.u32 2475754826, %v291
    %v298 = vshrl.u32 2131351028, %v292
    %v299 = vor.u32 %v297, %v298
    %v300 = vshll.u32 2131351028, %v291
    %v301 = vshrl.u32 2102212464, %v292
    %v302 = vor.u32 %v300, %v301
    %v303 = vshll.u32 2102212464, %v291
    %v304 = vshrl.u32 920167782, %v292
    %v305 = vor.u32 %v303, %v304
    %v306 = vshll.u32 920167782, %v291
    %v307 = vshrl.u32 1326507024, %v292
    %v308 = vor.u32 %v306, %v307
    %vm309 = vcmp.lt.s32.totalorder %v290, 1
    %vm310 = vcmp.lt.s32.totalorder %v290, 2
    %vm311 = vcmp.lt.s32.totalorder %v290, 3
    %vm312 = vcmp.lt.s32.totalorder %v290, 4
    %v313 = vsel %vm309, %v293, %v296
    %v314 = vsel %vm312, %v302, 2102212464
    %v315 = vsel %vm311, %v299, %v314
    %v316 = vsel %vm310, %v313, %v315
    %v317 = vsel %vm309, %v296, %v299
    %v318 = vsel %vm312, %v305, 920167782
    %v319 = vsel %vm311, %v302, %v318
    %v320 = vsel %vm310, %v317, %v319
    %v321 = vsel %vm309, %v299, %v302
    %v322 = vsel %vm312, %v308, 1326507024
    %v323 = vsel %vm311, %v305, %v322
    %v324 = vsel %vm310, %v321, %v323
    %v325 = vshll.u32 %v285, 8
    %v326 = vmul.u32.u64.compose %v325, %v324
    %v327 = vextract.low.u32 %v326
    %v328 = vextract.high.u32 %v326
    %v329 = vmul.u32.u64.compose %v325, %v320
    %v330 = vextract.low.u32 %v329
    %v331 = vextract.high.u32 %v329
    %v332 = vmul.u32 %v325, %v316
    %v333 = vadd.s32 %v328, %v330
    %vm334 = vc.u32 %v328, %v330
    %v335 = vadd.s32 %v331, 1
    %v336 = vsel %vm334, %v335, %v331
    %v337 = vadd.s32 %v332, %v336
    %v338 = vadd.s32 %v337, 536870912
    %v339 = vshrl.u32 %v338, 30
    %v340 = vshll.u32 %v339, 30
    %v341 = vsub.s32 %v337, %v340
    %vm342 = vcmp.lt.s32.totalorder %v341, 0
    %v343 = vsub.s32 0, %v341
    %v344 = vsel %vm342, %v343, %v341
    %v345 = vclz %v344
    %v346 = vsub.s32 %v345, 2
    %vm347 = vcmp.gt.s32.totalorder 0, %v346
    %v348 = vsel %vm347, 0, %v346
    %v349 = vsub.s32 32, %v348
    %v350 = vshll.u32 %v341, %v348
    %v351 = vshrl.u32 %v333, %v349
    %v352 = vor.u32 %v350, %v351
    %v353 = vsub.s32 4294967266, %v348
    %v354 = vadd.s32 %v353, 127
    %v355 = vshll.u32 %v354, 23
    %v356 = vor.u32 4788187, %v355
    %v357 = vand.u32 2147483647, %v356
    %v359 = vcvt.s32.f32 %v352
    %v360 = vmul.f32 %v359, %v357
    %v361 = vxor.u32 %v360, 2147483648
    %v362 = vsel %vm279, %v361, %v360
    %v363 = vsub.s32 4, %v339
    %v364 = vsel %vm279, %v363, %v339
    %v365 = vsel %vm278, %v46, %v362
    %v366 = vsel %vm278, 0, %v364
    %v367 = vcosq.f32.pop %v365
    %v368 = vsinq.f32.pop %v365
    %vm369 = vweird.f32 %v46
    %v370 = vand.u32 %v366, 3
    %vm371 = vcmp.lt.s32.totalorder %v370, 2
    %vm372 = vcmp.eq.s32.totalorder %v370, 0
    %v373 = vxor.u32 %v368, 2147483648
    %v374 = vsel %vm372, %v367, %v373
    %vm375 = vcmp.eq.s32.totalorder %v370, 2
    %v376 = vxor.u32 %v367, 2147483648
    %v377 = vsel %vm375, %v376, %v368
    %v378 = vsel %vm371, %v374, %v377
    %v379 = vsel %vm369, nan, %v378
    %v380 = vand.u32 2147483647, %v46
    %vm381 = vcmp.le.f32.partialorder %v380, 0.7853982
    %vm382 = vcmp.lt.s32.totalorder %v46, 0
    %v383 = vand.u32 %v46, 2139095040
    %v384 = vshrl.u32 %v383, 23
    %v385 = vsub.s32 %v384, 127
    %v386 = vand.u32 2147483647, %v46
    %v387 = vand.u32 %v386, 8388607
    %v388 = vor.u32 %v387, 8388608
    %v389 = vsub.s32 0, %v388
    %v390 = vadd.s32 %v385, 1
    %vm391 = vcmp.gt.s32.totalorder %v390, 0
    %v392 = vsel %vm391, %v390, 0
    %v393 = vshrl.u32 %v392, 5
    %v394 = vand.u32 %v392, 31
    %v395 = vsub.s32 32, %v394
    %v396 = vshrl.u32 683565275, %v395
    %v397 = vshll.u32 683565275, %v394
    %v398 = vshrl.u32 2475754826, %v395
    %v399 = vor.u32 %v397, %v398
    %v400 = vshll.u32 2475754826, %v394
    %v401 = vshrl.u32 2131351028, %v395
    %v402 = vor.u32 %v400, %v401
    %v403 = vshll.u32 2131351028, %v394
    %v404 = vshrl.u32 2102212464, %v395
    %v405 = vor.u32 %v403, %v404
    %v406 = vshll.u32 2102212464, %v394
    %v407 = vshrl.u32 920167782, %v395
    %v408 = vor.u32 %v406, %v407
    %v409 = vshll.u32 920167782, %v394
    %v410 = vshrl.u32 1326507024, %v395
    %v411 = vor.u32 %v409, %v410
    %vm412 = vcmp.lt.s32.totalorder %v393, 1
    %vm413 = vcmp.lt.s32.totalorder %v393, 2
    %vm414 = vcmp.lt.s32.totalorder %v393, 3
    %vm415 = vcmp.lt.s32.totalorder %v393, 4
    %v416 = vsel %vm412, %v396, %v399
    %v417 = vsel %vm415, %v405, 2102212464
    %v418 = vsel %vm414, %v402, %v417
    %v419 = vsel %vm413, %v416, %v418
    %v420 = vsel %vm412, %v399, %v402
    %v421 = vsel %vm415, %v408, 920167782
    %v422 = vsel %vm414, %v405, %v421
    %v423 = vsel %vm413, %v420, %v422
    %v424 = vsel %vm412, %v402, %v405
    %v425 = vsel %vm415, %v411, 1326507024
    %v426 = vsel %vm414, %v408, %v425
    %v427 = vsel %vm413, %v424, %v426
    %v428 = vshll.u32 %v388, 8
    %v429 = vmul.u32.u64.compose %v428, %v427
    %v430 = vextract.low.u32 %v429
    %v431 = vextract.high.u32 %v429
    %v432 = vmul.u32.u64.compose %v428, %v423
    %v433 = vextract.low.u32 %v432
    %v434 = vextract.high.u32 %v432
    %v435 = vmul.u32 %v428, %v419
    %v436 = vadd.s32 %v431, %v433
    %vm437 = vc.u32 %v431, %v433
    %v438 = vadd.s32 %v434, 1
    %v439 = vsel %vm437, %v438, %v434
    %v440 = vadd.s32 %v435, %v439
    %v441 = vadd.s32 %v440, 536870912
    %v442 = vshrl.u32 %v441, 30
    %v443 = vshll.u32 %v442, 30
    %v444 = vsub.s32 %v440, %v443
    %vm445 = vcmp.lt.s32.totalorder %v444, 0
    %v446 = vsub.s32 0, %v444
    %v447 = vsel %vm445, %v446, %v444
    %v448 = vclz %v447
    %v449 = vsub.s32 %v448, 2
    %vm450 = vcmp.gt.s32.totalorder 0, %v449
    %v451 = vsel %vm450, 0, %v449
    %v452 = vsub.s32 32, %v451
    %v453 = vshll.u32 %v444, %v451
    %v454 = vshrl.u32 %v436, %v452
    %v455 = vor.u32 %v453, %v454
    %v456 = vsub.s32 4294967266, %v451
    %v457 = vadd.s32 %v456, 127
    %v458 = vshll.u32 %v457, 23
    %v459 = vor.u32 4788187, %v458
    %v460 = vand.u32 2147483647, %v459
    %v462 = vcvt.s32.f32 %v455
    %v463 = vmul.f32 %v462, %v460
    %v464 = vxor.u32 %v463, 2147483648
    %v465 = vsel %vm382, %v464, %v463
    %v466 = vsub.s32 4, %v442
    %v467 = vsel %vm382, %v466, %v442
    %v468 = vsel %vm381, %v46, %v465
    %v469 = vsel %vm381, 0, %v467
    %v470 = vcosq.f32.pop %v468
    %v471 = vsinq.f32.pop %v468
    %vm472 = vweird.f32 %v46
    %v473 = vadd.s32 %v469, 3
    %v474 = vand.u32 %v473, 3
    %vm475 = vcmp.lt.s32.totalorder %v474, 2
    %vm476 = vcmp.eq.s32.totalorder %v474, 0
    %v477 = vxor.u32 %v471, 2147483648
    %v478 = vsel %vm476, %v470, %v477
    %vm479 = vcmp.eq.s32.totalorder %v474, 2
    %v480 = vxor.u32 %v470, 2147483648
    %v481 = vsel %vm479, %v480, %v471
    %v482 = vsel %vm475, %v478, %v481
    %v483 = vsel %vm472, nan, %v482
    %v484 = vmul.f32 %v379, %v273
    %v485 = vmul.f32 %v483, %v276
    %v486 = vsub.f32 %v484, %v485
    %v487 = vmul.f32 %v483, %v273
    %v488 = vmul.f32 %v379, %v276
    %v489 = vadd.f32 %v487, %v488
    %v490 = vmul.f32 %v48, 0.1
    %v491 = vmul.f32 %v490, %v486
    %v492 = vadd.f32 %v42, %v491
    %493 = vst [vmem:[#allocation7] sm:$0x1] %v492
    %v494 = vmul.f32 %v490, %v489
    %v495 = vadd.f32 %v44, %v494
    %s496 = scalar_lea.vmem [#allocation7], 1
    %497 = vst [vmem:[%s496] sm:$0x1] %v495
    %v498 = vmul.f32 %v48, %v276
    %v499 = vstv %s41
    %v500 = vmul.f32 %v498, %v499
    %v501 = vadd.f32 %v46, %v500
    %s502 = scalar_lea.vmem [#allocation7], 2
    %503 = vst [vmem:[%s502] sm:$0x1] %v501
    %v504 = vstv %s37
    %v505 = vmul.f32 %v52, %v504
    %v506 = vadd.f32 %v48, %v505
    %v507 = vmax.f32 %v506, 0.0
    %s508 = scalar_lea.vmem [#allocation7], 3
    %509 = vst [vmem:[%s508] sm:$0x1] %v507
    // Predicated region
    $region10: #{tpu_custom_call.1} parent=1 // pred_check
      _
    $region11: #{tpu_custom_call.1} parent=1 // pred_check_branch
      %511 = sbr.rel (0) target = $region13
    $region12: #{tpu_custom_call.1} parent=1 // pred_region
      %s513 = ssub.s32 64, 64
      %514 = vsyncadd [#allocation6], %s513
      %s515 = sshll.u32 [#allocation7], 4
      %s516 = int_to_ptr.vmem [resolvable:$true] %s515
      %521 = dma.vmem_to_hbm [thread:$0]  %s516, 64, %s2, [#allocation6], 16, 16, 1
    $region13: #{tpu_custom_call.1} parent=1 // pred_fallthru
      _
    // Predicated region
    $region14: #{tpu_custom_call.1} parent=1 // pred_check
      _
    $region15: #{tpu_custom_call.1} parent=1 // pred_check_branch
      %523 = sbr.rel (0) target = $region17
    $region16: #{tpu_custom_call.1} parent=1 // pred_region
      %524 = dma.done [#allocation6], 64
    $region17: #{tpu_custom_call.1} parent=1 // pred_fallthru
      _
    %525 = vsyncpa [#allocation5], 1
    %526 = vsyncpa [#allocation6], 1

</llo_original>
